<compile_context>
chip_gen: v6e
topology: v6e:2x2x1
jax: 0.10.0
libtpu: 0.0.40
codegen_flags: <defaults>
</compile_context>

<pallas_src>
import jax
import jax.numpy as jnp
from jax.experimental import pallas as pl
from jax.experimental.pallas import tpu as pltpu

NEG_FILL = -1000000000.0  # exact fill value used by the PyTorch module
_MiB = 1024 * 1024


def _round_up(x, m):
    return ((x + m - 1) // m) * m


def _round_down(x, m):
    return (x // m) * m


def _physical_vmem_bytes():
    try:
        v = int(pltpu.get_tpu_info().vmem_capacity_bytes)
        if v > 0:
            return v
    except Exception:
        pass
    return 64 * _MiB  # conservative fallback (v7x per-core VMEM)


def _pick_tiles(B, C, itemsize, phys_vmem_bytes):
    """Generation-aware tile sizes.

    Budgets the double-buffered logits tile *and* the in-kernel f32 temporaries
    ((2*itemsize + 8) bytes per tile element) against ~3/4 of the scoped-VMEM
    limit, which is itself ~3/4 of physical VMEM (96 MiB on 128-MiB chips,
    48 MiB on v7x's 64 MiB).
    """
    limit = min((phys_vmem_bytes * 3) // 4, 96 * _MiB)
    budget = (limit * 3) // 4
    bytes_per_elem = 2 * itemsize + 8  # dbuf input + ~2 f32 [tile_b, tile_c] temps

    rows_full_c = budget // (bytes_per_elem * C)
    if rows_full_c >= min(256, _round_up(B, 8)):
        tile_c = C                      # class axis untiled (single chunk)
        max_rows = rows_full_c
    else:
        # LLM-scale C: chunk the class axis, keep ~256-row batch tiles.
        tile_c = _round_down(budget // (bytes_per_elem * 256), 128)
        tile_c = max(128, min(tile_c, 4096, _round_up(C, 128)))
        max_rows = budget // (bytes_per_elem * tile_c)

    tile_b = min(max_rows, 512)         # >=512 rows ~= 85% of HBM roofline
    if B >= 16:
        # keep at least 2 batch tiles so the "parallel" axis feeds both v7x cores
        tile_b = min(tile_b, _round_up(-(-B // 2), 8))
    tile_b = max(8, _round_down(tile_b, 8))
    return int(tile_b), int(tile_c), int(limit)


def ace_ce_kernel(logits_ref, bias_ref, lse_ref, m_sc, s_sc):
    # logits_ref : [TILE_B, TILE_C] source dtype (upcast here, not in HBM)
    # bias_ref   : [1, TILE_C] f32  additive mask row (0 kept / NEG_FILL masked)
    # lse_ref    : [TILE_B, 1]  f32 per-row logsumexp of the masked logits
    # m_sc, s_sc : [TILE_B, 1]  f32 online-softmax running max / rescaled sum
    k = pl.program_id(1)

    @pl.when(k == 0)
    def _():
        m_sc[...] = jnp.full_like(m_sc, -jnp.inf)
        s_sc[...] = jnp.zeros_like(s_sc)

    # additive bias instead of (keep != 0) + where: one VPU add per element
    x = logits_ref[...].astype(jnp.float32) + bias_ref[...]     # [TILE_B, TILE_C]

    m_prev = m_sc[...]
    m_new = jnp.maximum(m_prev, jnp.max(x, axis=-1, keepdims=True))  # XLU reduce
    alpha = jnp.exp(m_prev - m_new)            # exp(-inf) == 0 on the first chunk
    p = jnp.exp(x - m_new)                     # EUP
    s_sc[...] = alpha * s_sc[...] + jnp.sum(p, axis=-1, keepdims=True)
    m_sc[...] = m_new

    @pl.when(k == pl.num_programs(1) - 1)
    def _():
        lse_ref[...] = m_sc[...] + jnp.log(s_sc[...])


def ace_ce_loss(logits, labels, seen_max=-1, tile_b=None, tile_c=None):
    """logits: [B, C] (any float dtype), labels: [B] int, seen_max=-1 => empty seen_so_far."""
    B, C = logits.shape
    labels = labels.astype(jnp.int32)
    # TODO(synk): torch's ignore_index=-100 is not modeled (the module never uses it).

    # --- whole-batch preprocessing (tiny scatter / gather), hoisted ----------
    present = jnp.zeros((C,), dtype=jnp.bool_).at[labels].set(True)
    col = jnp.arange(C, dtype=jnp.int32)
    keep = present | ((col > seen_max) & (seen_max >= 0))
    bias_row = jnp.where(keep, 0.0, NEG_FILL).astype(jnp.float32).reshape(1, C)
    # label columns are always kept, so masked[b, label] == logits[b, label]
    picked = jnp.take_along_axis(logits, labels[:, None], axis=-1).astype(jnp.float32)

    # --- generation-aware tiling --------------------------------------------
    auto_b, auto_c, vmem_limit = _pick_tiles(B, C, logits.dtype.itemsize,
                                             _physical_vmem_bytes())
    tile_b = auto_b if tile_b is None else int(tile_b)
    tile_c = auto_c if tile_c is None else int(tile_c)

    B_pad = _round_up(B, tile_b)
    C_pad = C if tile_c == C else _round_up(C, tile_c)
    if B_pad != B or C_pad != C:
        logits = jnp.pad(logits, ((0, B_pad - B), (0, C_pad - C)))
    if C_pad != C:
        bias_row = jnp.pad(bias_row, ((0, 0), (0, C_pad - C)),
                           constant_values=NEG_FILL)

    nb, nc = B_pad // tile_b, C_pad // tile_c

    cost = pl.CostEstimate(
        flops=6 * B_pad * C_pad,
        transcendentals=B_pad * C_pad,
        bytes_accessed=B_pad * C_pad * logits.dtype.itemsize + 4 * (C_pad + B_pad),
    )

    lse = pl.pallas_call(
        ace_ce_kernel,
        out_shape=jax.ShapeDtypeStruct((B_pad, 1), jnp.float32),
        grid=(nb, nc),
        in_specs=[
            pl.BlockSpec((tile_b, tile_c), lambda i, k: (i, k)),  # logits tile
            pl.BlockSpec((1, tile_c), lambda i, k: (0, k)),       # bias chunk
        ],
        out_specs=pl.BlockSpec((tile_b, 1), lambda i, k: (i, 0)), # per-row lse
        scratch_shapes=[
            pltpu.VMEM((tile_b, 1), jnp.float32),  # running max
            pltpu.VMEM((tile_b, 1), jnp.float32),  # running sum-of-exp
        ],
        compiler_params=pltpu.CompilerParams(
            dimension_semantics=("parallel", "arbitrary"),
            vmem_limit_bytes=vmem_limit,
        ),
        cost_estimate=cost,
    )(logits, bias_row)

    # cross entropy: mean over the *real* batch of (lse - logits[b, labels[b]])
    total = jnp.sum(lse[:B, 0]) - jnp.sum(picked)
    return total / jnp.float32(B)


def _reference(logits, labels, seen_max=-1):
    """Plain-JAX reference mirroring the PyTorch module."""
    B, C = logits.shape
    onehot = jax.nn.one_hot(labels, C, dtype=jnp.bool_)
    present = jnp.any(onehot, axis=0)[None, :]
    col = jnp.arange(C)[None, :]
    keep = present | ((col > seen_max) & (seen_max >= 0))
    masked = jnp.where(keep, logits.astype(jnp.float32), NEG_FILL)
    logp = jax.nn.log_softmax(masked, axis=-1)
    return -jnp.mean(jnp.take_along_axis(logp, labels[:, None], axis=-1))


if __name__ == "__main__":
    key = jax.random.PRNGKey(0)
    k1, k2, k3, k4 = jax.random.split(key, 4)

    # Tests 1 & 2: small f32 problem, class axis untiled (tile_c == C).
    B, C = 16, 32
    logits = jax.random.normal(k1, (B, C), dtype=jnp.float32)
    labels = jax.random.randint(k2, (B,), 0, C, dtype=jnp.int32)

    # module __init__ state: seen_so_far empty -> seen_max = -1
    loss = jax.block_until_ready(ace_ce_loss(logits, labels, seen_max=-1))
    ref = _reference(logits, labels, seen_max=-1)
    assert jnp.allclose(loss, ref, rtol=1e-5, atol=1e-5), (loss, ref)

    # after some classes have been "seen": columns > seen_max are also unmasked
    loss2 = jax.block_until_ready(ace_ce_loss(logits, labels, seen_max=5))
    ref2 = _reference(logits, labels, seen_max=5)
    assert jnp.allclose(loss2, ref2, rtol=1e-5, atol=1e-5), (loss2, ref2)

    # Test 3: exercise batch padding + the chunked (online-LSE) class axis
    # with a bf16 input (grid = 2 batch tiles x 4 class chunks, padded C).
    B3, C3 = 24, 400
    logits3 = jax.random.normal(k3, (B3, C3), dtype=jnp.float32).astype(jnp.bfloat16)
    labels3 = jax.random.randint(k4, (B3,), 0, C3, dtype=jnp.int32)
    loss3 = jax.block_until_ready(
        ace_ce_loss(logits3, labels3, seen_max=10, tile_b=16, tile_c=128))
    ref3 = _reference(logits3, labels3, seen_max=10)
    assert jnp.allclose(loss3, ref3, rtol=1e-4, atol=1e-4), (loss3, ref3)

    print("KERNEL_OK")
</pallas_src>

<mosaic_0001>
module attributes {stable_mosaic.version = 11 : i64} {
  func.func @ace_ce_kernel(%arg0: i32, %arg1: i32, %arg2: memref<8x32xf32, #tpu.memory_space<vmem>>, %arg3: memref<1x32xf32, #tpu.memory_space<vmem>>, %arg4: memref<8x1xf32, #tpu.memory_space<vmem>>, %arg5: memref<8x1xf32, #tpu.memory_space<vmem>>, %arg6: memref<8x1xf32, #tpu.memory_space<vmem>>) attributes {dimension_semantics = [#tpu.dimension_semantics<parallel>, #tpu.dimension_semantics<arbitrary>], iteration_bounds = array<i64: 2, 1>, scalar_prefetch = 0 : i64, scratch_operands = 2 : i64, tpu.core_type = #tpu.core_type<tc>, window_params = [{transform_indices = @transform_0, window_bounds = array<i64: 8, 32>}, {transform_indices = @transform_1, window_bounds = array<i64: 1, 32>}, {transform_indices = @transform_2, window_bounds = array<i64: 8, 1>}]} {
    %c0_i32 = arith.constant 0 : i32
    %0 = arith.cmpi eq, %arg1, %c0_i32 : i32
    %1 = arith.extui %0 : i1 to i32
    %c0_i32_0 = arith.constant 0 : i32
    %2 = arith.cmpi ne, %1, %c0_i32_0 : i32
    scf.if %2 {
      %cst_15 = arith.constant 0xFF800000 : f32
      %26 = vector.broadcast %cst_15 : f32 to vector<8x1xf32>
      %c0_16 = arith.constant 0 : index
      %c0_17 = arith.constant 0 : index
      %27 = vector.load %arg5[%c0_16, %c0_17] : memref<8x1xf32, #tpu.memory_space<vmem>>, vector<8x1xf32>
      tpu.vector_store %arg5[%c0_16, %c0_17], %26 {strides = array<i32>} : memref<8x1xf32, #tpu.memory_space<vmem>>, vector<8x1xf32>,
      %cst_18 = arith.constant 0.000000e+00 : f32
      %28 = vector.broadcast %cst_18 : f32 to vector<8x1xf32>
      %c0_19 = arith.constant 0 : index
      %c0_20 = arith.constant 0 : index
      %29 = vector.load %arg6[%c0_19, %c0_20] : memref<8x1xf32, #tpu.memory_space<vmem>>, vector<8x1xf32>
      tpu.vector_store %arg6[%c0_19, %c0_20], %28 {strides = array<i32>} : memref<8x1xf32, #tpu.memory_space<vmem>>, vector<8x1xf32>,
    } else {
    }
    %c0 = arith.constant 0 : index
    %c0_1 = arith.constant 0 : index
    %3 = vector.load %arg2[%c0, %c0_1] : memref<8x32xf32, #tpu.memory_space<vmem>>, vector<8x32xf32>
    %c0_2 = arith.constant 0 : index
    %c0_3 = arith.constant 0 : index
    %4 = vector.load %arg3[%c0_2, %c0_3] : memref<1x32xf32, #tpu.memory_space<vmem>>, vector<1x32xf32>
    %5 = vector.broadcast %4 : vector<1x32xf32> to vector<8x32xf32>
    %6 = arith.addf %3, %5 : vector<8x32xf32>
    %c0_4 = arith.constant 0 : index
    %c0_5 = arith.constant 0 : index
    %7 = vector.load %arg5[%c0_4, %c0_5] : memref<8x1xf32, #tpu.memory_space<vmem>>, vector<8x1xf32>
    %cst = arith.constant dense<0xFF800000> : vector<8xf32>
    %8 = vector.multi_reduction <maximumf>, %6, %cst [1] : vector<8x32xf32> to vector<8xf32>
    %9 = vector.shape_cast %8 : vector<8xf32> to vector<8x1xf32>
    %10 = arith.maximumf %7, %9 : vector<8x1xf32>
    %11 = arith.subf %7, %10 : vector<8x1xf32>
    %12 = math.exp %11 : vector<8x1xf32>
    %13 = vector.broadcast %10 : vector<8x1xf32> to vector<8x32xf32>
    %14 = arith.subf %6, %13 : vector<8x32xf32>
    %15 = math.exp %14 : vector<8x32xf32>
    %c0_6 = arith.constant 0 : index
    %c0_7 = arith.constant 0 : index
    %16 = vector.load %arg6[%c0_6, %c0_7] : memref<8x1xf32, #tpu.memory_space<vmem>>, vector<8x1xf32>
    %17 = arith.mulf %12, %16 : vector<8x1xf32>
    %cst_8 = arith.constant dense<0.000000e+00> : vector<8xf32>
    %18 = vector.multi_reduction <add>, %15, %cst_8 [1] : vector<8x32xf32> to vector<8xf32>
    %19 = vector.shape_cast %18 : vector<8xf32> to vector<8x1xf32>
    %20 = arith.addf %17, %19 : vector<8x1xf32>
    %c0_9 = arith.constant 0 : index
    %c0_10 = arith.constant 0 : index
    %21 = vector.load %arg6[%c0_9, %c0_10] : memref<8x1xf32, #tpu.memory_space<vmem>>, vector<8x1xf32>
    tpu.vector_store %arg6[%c0_9, %c0_10], %20 {strides = array<i32>} : memref<8x1xf32, #tpu.memory_space<vmem>>, vector<8x1xf32>,
    %c0_11 = arith.constant 0 : index
    %c0_12 = arith.constant 0 : index
    %22 = vector.load %arg5[%c0_11, %c0_12] : memref<8x1xf32, #tpu.memory_space<vmem>>, vector<8x1xf32>
    tpu.vector_store %arg5[%c0_11, %c0_12], %10 {strides = array<i32>} : memref<8x1xf32, #tpu.memory_space<vmem>>, vector<8x1xf32>,
    %c0_i32_13 = arith.constant 0 : i32
    %23 = arith.cmpi eq, %arg1, %c0_i32_13 : i32
    %24 = arith.extui %23 : i1 to i32
    %c0_i32_14 = arith.constant 0 : i32
    %25 = arith.cmpi ne, %24, %c0_i32_14 : i32
    scf.if %25 {
      %c0_15 = arith.constant 0 : index
      %c0_16 = arith.constant 0 : index
      %26 = vector.load %arg5[%c0_15, %c0_16] : memref<8x1xf32, #tpu.memory_space<vmem>>, vector<8x1xf32>
      %c0_17 = arith.constant 0 : index
      %c0_18 = arith.constant 0 : index
      %27 = vector.load %arg6[%c0_17, %c0_18] : memref<8x1xf32, #tpu.memory_space<vmem>>, vector<8x1xf32>
      %28 = math.log %27 : vector<8x1xf32>
      %29 = arith.addf %26, %28 : vector<8x1xf32>
      %c0_19 = arith.constant 0 : index
      %c0_20 = arith.constant 0 : index
      %30 = vector.load %arg4[%c0_19, %c0_20] : memref<8x1xf32, #tpu.memory_space<vmem>>, vector<8x1xf32>
      tpu.vector_store %arg4[%c0_19, %c0_20], %29 {strides = array<i32>} : memref<8x1xf32, #tpu.memory_space<vmem>>, vector<8x1xf32>,
    } else {
    }
    return
  }
  func.func @transform_0(%arg0: i32, %arg1: i32) -> (i32, i32) {
    %c0_i32 = arith.constant 0 : i32
    return %arg0, %arg1 : i32, i32
  }
  func.func @transform_1(%arg0: i32, %arg1: i32) -> (i32, i32) {
    %c0_i32 = arith.constant 0 : i32
    %c0_i32_0 = arith.constant 0 : i32
    return %c0_i32, %arg1 : i32, i32
  }
  func.func @transform_2(%arg0: i32, %arg1: i32) -> (i32, i32) {
    %c0_i32 = arith.constant 0 : i32
    %c0_i32_0 = arith.constant 0 : i32
    return %arg0, %c0_i32 : i32, i32
  }
}

</mosaic_0001>

<llo_original>
// kernel: tpu_custom_call.1
$region0: #{tpu_custom_call.1}
  #allocation0 [shape = 'u32[]', space=smem, size = 0x4, offset = 0x4, fixed_abs, tag = 'smem constant byte address 0x4 - core index']
  #allocation1 [shape = 'u32[144,128]{1,0:T(1,128)}', space=vmem, size = 0x12000, scoped, tag = 'internal scratch']
  #allocation2 [shape = 'f32[8,1]{1,0:T(8,128)}', space=vmem, size = 0x1000, scoped, tag = 'scratch operand']
  #allocation3 [shape = 'f32[8,1]{1,0:T(8,128)}', space=vmem, size = 0x1000, scoped, tag = 'scratch operand']
  %s0 = inlined_call_operand.hbm [shape: f32[16,32], index: 0, kind: input, shape index: {}]
  %s1 = inlined_call_operand.vmem [shape: f32[1,32], index: 1, kind: input, shape index: {}]
  %s2 = inlined_call_operand.vmem [shape: f32[16,1], index: 2, kind: output, shape index: {}]
  %s3 = sld [smem:[#allocation0]]
  $region53: #{tpu_custom_call.1} parent=0
    _
  %s5 = ssub.s32 1, %s3
  %s6 = scalar_select 0, %s5, %s3
  $region1: #{tpu_custom_call.1} parent=0
    #allocation4 [shape = 'u8[8192]{0}', space=vmem, size = 0x2000, scoped, tag = 'input window, operand 0']
    #allocation5 [shape = 's32[2]{0}', space=sflag, size = 0x8, scoped, tag = 'scoped memory for tpu_custom_call.1']
    %7 = vsyncpa [#allocation5], 0
    %s8 = scalar_lea.sflag [#allocation5], 1
    %9 = vsyncpa %s8, 0
    loop: start=0, step=1, limit=4
    $region2: #{tpu_custom_call.1} parent=1 // loop_pre_header
      _
    $region3: #{tpu_custom_call.1} parent=1 // loop_header
      %s11 = sphi 0, %s15
      %p12 = scmp.ge.s32.totalorder %s11, 4
      %s18 = sphi 0, %s30
      %s19 = sphi 0, %s26
      %s20 = sphi 0, %s18
      %s21 = sphi 0, %s19
      %s22 = sphi 0, %s20
      %s23 = sphi 0, %s21
      %s35 = sphi 0, %s37
      %s38 = sphi 0, %s35
      %s39 = sphi 0, %s38
      %s55 = sphi 0, %s39
      %s61 = sphi 0, %s63
      %s64 = sphi 0, %s61
      %s65 = sphi 0, %s64
      %s81 = sphi 0, %s65
      %s87 = sphi 0, %s89
      %s90 = sphi 0, %s87
      %s91 = sphi 0, %s90
      %s107 = sphi 0, %s91
    $region4: #{tpu_custom_call.1} parent=1 // loop_header_branch
      %14 = sbr.rel (%p12) target = $region8
    $region5: #{tpu_custom_call.1} parent=1 // loop_body
      %s16 = ssub.s32 %s11, 1
      %s17 = ssub.s32 %s11, 2
      %s24 = sadd.s32 1, %s19
      %p25 = scmp.ge.s32.totalorder %s24, 1
      %s26 = scalar_select %p25, 0, %s24
      %s27 = sadd.s32 1, %s18
      %s28 = scalar_select %p25, %s27, %s18
      %p29 = scmp.ge.s32.totalorder %s28, 2
      %s30 = scalar_select %p29, 0, %s28
      %s31 = ssub.s32 %s18, %s30
      %s32 = ssub.s32 %s19, %s26
      %s33 = sor.u32 %s31, %s32
      %p34 = scmp.eq.s32.totalorder %s33, 0
      %s36 = sadd.s32 %s35, 1
      %s37 = scalar_select %p34, %s35, %s36
      %p40 = pneg %p34
      %p41 = scmp.eq.s32.totalorder %s11, 1
      %p42 = por %p40, %p41
      %p43 = scmp.ne.s32.totalorder %s35, %s38
      %p44 = scmp.eq.s32.totalorder %s11, 0
      %p45 = por %p43, %p44
      %p46 = scmp.ne.s32.totalorder %s35, %s38
      %p47 = scmp.eq.s32.totalorder %s16, 1
      %p48 = por %p46, %p47
      %p49 = scmp.ne.s32.totalorder %s38, %s39
      %p50 = scmp.eq.s32.totalorder %s16, 0
      %p51 = por %p49, %p50
      %p52 = scmp.ne.s32.totalorder %s38, %s39
      %p53 = scmp.eq.s32.totalorder %s17, 1
      %p54 = por %p52, %p53
      %p56 = scmp.ne.s32.totalorder %s39, %s55
      %p57 = scmp.eq.s32.totalorder %s17, 0
      %p58 = por %p56, %p57
      %s59 = ssub.s32 %s19, %s26
      %p60 = scmp.eq.s32.totalorder %s59, 0
      %s62 = sadd.s32 %s61, 1
      %s63 = scalar_select %p60, %s61, %s62
      %p66 = pneg %p60
      %p67 = scmp.eq.s32.totalorder %s11, 1
      %p68 = por %p66, %p67
      %p69 = scmp.ne.s32.totalorder %s61, %s64
      %p70 = scmp.eq.s32.totalorder %s11, 0
      %p71 = por %p69, %p70
      %p72 = scmp.ne.s32.totalorder %s61, %s64
      %p73 = scmp.eq.s32.totalorder %s16, 1
      %p74 = por %p72, %p73
      %p75 = scmp.ne.s32.totalorder %s64, %s65
      %p76 = scmp.eq.s32.totalorder %s16, 0
      %p77 = por %p75, %p76
      %p78 = scmp.ne.s32.totalorder %s64, %s65
      %p79 = scmp.eq.s32.totalorder %s17, 1
      %p80 = por %p78, %p79
      %p82 = scmp.ne.s32.totalorder %s65, %s81
      %p83 = scmp.eq.s32.totalorder %s17, 0
      %p84 = por %p82, %p83
      %s85 = ssub.s32 %s18, %s30
      %p86 = scmp.eq.s32.totalorder %s85, 0
      %s88 = sadd.s32 %s87, 1
      %s89 = scalar_select %p86, %s87, %s88
      %p92 = pneg %p86
      %p93 = scmp.eq.s32.totalorder %s11, 1
      %p94 = por %p92, %p93
      %p95 = scmp.ne.s32.totalorder %s87, %s90
      %p96 = scmp.eq.s32.totalorder %s11, 0
      %p97 = por %p95, %p96
      %p98 = scmp.ne.s32.totalorder %s87, %s90
      %p99 = scmp.eq.s32.totalorder %s16, 1
      %p100 = por %p98, %p99
      %p101 = scmp.ne.s32.totalorder %s90, %s91
      %p102 = scmp.eq.s32.totalorder %s16, 0
      %p103 = por %p101, %p102
      %p104 = scmp.ne.s32.totalorder %s90, %s91
      %p105 = scmp.eq.s32.totalorder %s17, 1
      %p106 = por %p104, %p105
      %p108 = scmp.ne.s32.totalorder %s91, %s107
      %p109 = scmp.eq.s32.totalorder %s17, 0
      %p110 = por %p108, %p109
      %p111 = scmp.le.s32.totalorder 1, %s11
      %p112 = scmp.lt.s32.totalorder %s11, 3
      %p113 = pnand %p111, %p112
      %p114 = pneg %p113
      // Predicated region
      $region9: #{tpu_custom_call.1} parent=5 // pred_check
        _
      $region10: #{tpu_custom_call.1} parent=5 // pred_check_branch
        %116 = sbr.rel (%p113) target = $region12
      $region11: #{tpu_custom_call.1} parent=5 // pred_region
        %s117 = ssub.s32 %s11, 1
        // Predicated region
        $region13: #{tpu_custom_call.1} parent=11 // pred_check
          %p118 = pneg %p77
        $region14: #{tpu_custom_call.1} parent=11 // pred_check_branch
          %120 = sbr.rel (%p118) target = $region16
        $region15: #{tpu_custom_call.1} parent=11 // pred_region
          %p121 = scmp.lt.s32.totalorder %s21, 0
          %s122 = scalar_select %p121, %s21, 0
          %s123 = scalar_lea.vmem %s1, %s122
        $region16: #{tpu_custom_call.1} parent=11 // pred_fallthru
          _
      $region12: #{tpu_custom_call.1} parent=5 // pred_fallthru
        _
      %p124 = scmp.lt.s32.totalorder %s11, 2
      // Predicated region
      $region17: #{tpu_custom_call.1} parent=5 // pred_check
        %p125 = pneg %p124
      $region18: #{tpu_custom_call.1} parent=5 // pred_check_branch
        %127 = sbr.rel (%p125) target = $region20
      $region19: #{tpu_custom_call.1} parent=5 // pred_region
        // Predicated region
        $region21: #{tpu_custom_call.1} parent=19 // pred_check
          %p128 = pneg %p45
        $region22: #{tpu_custom_call.1} parent=19 // pred_check_branch
          %130 = sbr.rel (%p128) target = $region24
        $region23: #{tpu_custom_call.1} parent=19 // pred_region
          %s131 = sand.u32 %s35, 1
          %s132 = scalar_lea.sflag [#allocation5], %s131
          %s133 = sand.u32 %s35, 1
          %s134 = smul.addr %s133, 8
          %s135 = scalar_lea.vmem [#allocation4], %s134
          %s137 = ssub.s32 128, 128
          %138 = vsyncadd %s132, %s137
          %s139 = sadd.s32 %s19, %s18
          %s140 = smul.addr %s139, 128
          %s141 = scalar_lea.hbm %s0, %s140
          %s143 = sshll.u32 %s135, 4
          %s144 = int_to_ptr.vmem [resolvable:$true] %s143
          %146 = dma.hbm_to_vmem [thread:$0]  %s141, 128, %s144, %s132
        $region24: #{tpu_custom_call.1} parent=19 // pred_fallthru
          _
      $region20: #{tpu_custom_call.1} parent=5 // pred_fallthru
        _
      %p147 = scmp.le.s32.totalorder 1, %s11
      %p148 = scmp.lt.s32.totalorder %s11, 3
      %p149 = pnand %p147, %p148
      %p150 = pneg %p149
      // Predicated region
      $region25: #{tpu_custom_call.1} parent=5 // pred_check
        _
      $region26: #{tpu_custom_call.1} parent=5 // pred_check_branch
        %152 = sbr.rel (%p149) target = $region28
      $region27: #{tpu_custom_call.1} parent=5 // pred_region
        %s153 = ssub.s32 %s11, 1
        %s154 = sand.u32 %s38, 1
        %s155 = scalar_lea.sflag [#allocation5], %s154
        %s156 = sand.u32 %s38, 1
        %s157 = smul.addr %s156, 8
        %s158 = scalar_lea.vmem [#allocation4], %s157
        // Predicated region
        $region29: #{tpu_custom_call.1} parent=27 // pred_check
          %p159 = pneg %p51
        $region30: #{tpu_custom_call.1} parent=27 // pred_check_branch
          %161 = sbr.rel (%p159) target = $region32
        $region31: #{tpu_custom_call.1} parent=27 // pred_region
          %162 = dma.done %s155, 128
        $region32: #{tpu_custom_call.1} parent=27 // pred_fallthru
          _
        %s163 = sand.u32 %s38, 1
        %s164 = scalar_lea.sflag [#allocation5], %s163
        %s165 = sand.u32 %s38, 1
        %s166 = smul.addr %s165, 8
        %s167 = scalar_lea.vmem [#allocation4], %s166
        %p168 = pneg %p51
        %p169 = pneg %p48
        %p170 = scmp.lt.s32.totalorder %s21, 0
        %s171 = scalar_select %p170, %s21, 0
        %s172 = scalar_lea.vmem %s1, %s171
        %p173 = pneg %p77
        %p174 = pneg %p74
        %p175 = pneg %p103
        %p176 = pneg %p100
        %p177 = scmp.lt.s32.totalorder %s20, 1
        %s178 = scalar_select %p177, %s20, 1
        %s179 = smul.addr %s178, 8
        %s180 = scalar_lea.vmem %s2, %s179
        %p181 = scmp.lt.s32.totalorder %s21, 0
        %s182 = scalar_select %p181, %s21, 0
        %s183 = scalar_lea.vmem %s1, %s182
        %p184 = scmp.lt.s32.totalorder %s20, 1
        %s185 = scalar_select %p184, %s20, 1
        %s186 = smul.addr %s185, 8
        %s187 = scalar_lea.vmem %s2, %s186
        %p188 = scmp.eq.s32.totalorder %s21, 0
        // Predicated region
        $region33: #{tpu_custom_call.1} parent=27 // pred_check
          %p189 = pneg %p188
        $region34: #{tpu_custom_call.1} parent=27 // pred_check_branch
          %191 = sbr.rel (%p189) target = $region36
        $region35: #{tpu_custom_call.1} parent=27 // pred_region
          %vm192 = vcmask 7168
          %193 = vst.msk [vmem:[#allocation2] sm:$0xff] %vm192, -inf
          %194 = vst.msk [vmem:[#allocation3] sm:$0xff] %vm192, 0.0
        $region36: #{tpu_custom_call.1} parent=27 // pred_fallthru
          _
        %v195 = vld [vmem:[%s158] sm:$0xff]
        %v196 = vld [vmem:[%s183] sm:$0x1]
        %v198 = vlaneseq
        %v199 = vshrl.u32 %v198, 7
        %v200 = vsub.s32 0, %v199
        %v201 = vrot.slane %v196, %v200
        %v203 = vadd.f32 %v195, %v201
        %v204 = vld [vmem:[#allocation2] sm:$0xff]
        %vm205 = vcmask 261120
        %v206 = vsel %vm205, %v203, -inf
        %207 = vmax.xlane.f32.xlu0 %v206
        %v208 = vpop.xlane.xlu0 %207
        %v209 = vmax.f32 %v204, %v208
        %v210 = vsub.f32 %v204, %v209
        %v211 = vmul.f32 %v210, 1.442695
        %v212 = vpow.pop %v211
        %214 = vset.pattern.permute.xlu0 0
        %215 = vperm.xlu0 %214, %v209
        %v216 = vpop.permute.xlu0 %215
        %v218 = vsub.f32 %v203, %v216
        %v219 = vmul.f32 %v218, 1.442695
        %v220 = vpow.pop %v219
        %v221 = vld [vmem:[#allocation3] sm:$0xff]
        %v222 = vmul.f32 %v212, %v221
        %v223 = vsel %vm205, %v220, 0.0
        %224 = vadd.xlane.f32.xlu0 %v223
        %v225 = vpop.xlane.xlu0 %224
        %v226 = vadd.f32 %v222, %v225
        %vm227 = vcmask 7168
        %228 = vst.msk [vmem:[#allocation3] sm:$0xff] %vm227, %v226
        %229 = vst.msk [vmem:[#allocation2] sm:$0xff] %vm227, %v209
        // Predicated region
        $region37: #{tpu_custom_call.1} parent=27 // pred_check
          %p230 = pneg %p188
        $region38: #{tpu_custom_call.1} parent=27 // pred_check_branch
          %232 = sbr.rel (%p230) target = $region40
        $region39: #{tpu_custom_call.1} parent=27 // pred_region
          %v233 = vld [vmem:[#allocation2] sm:$0xff]
          %v234 = vld [vmem:[#allocation3] sm:$0xff]
          %v235 = vlog2.pop %v234
          %v236 = vmul.f32 %v235, 0.6931472
          %v237 = vadd.f32 %v233, %v236
          %238 = vst.msk [vmem:[%s187] sm:$0xff] %vm227, %v237
        $region40: #{tpu_custom_call.1} parent=27 // pred_fallthru
          _
        %p239 = scmp.lt.s32.totalorder %s20, 1
        %s240 = scalar_select %p239, %s20, 1
        %s241 = smul.addr %s240, 8
        %s242 = scalar_lea.vmem %s2, %s241
        // Predicated region
        $region41: #{tpu_custom_call.1} parent=27 // pred_check
          %p243 = pneg %p100
        $region42: #{tpu_custom_call.1} parent=27 // pred_check_branch
          %245 = sbr.rel (%p243) target = $region44
        $region43: #{tpu_custom_call.1} parent=27 // pred_region
          _
        $region44: #{tpu_custom_call.1} parent=27 // pred_fallthru
          _
      $region28: #{tpu_custom_call.1} parent=5 // pred_fallthru
        _
      %p246 = scmp.le.s32.totalorder 2, %s11
      // Predicated region
      $region45: #{tpu_custom_call.1} parent=5 // pred_check
        %p247 = pneg %p246
      $region46: #{tpu_custom_call.1} parent=5 // pred_check_branch
        %249 = sbr.rel (%p247) target = $region48
      $region47: #{tpu_custom_call.1} parent=5 // pred_region
        %s250 = ssub.s32 %s11, 2
        // Predicated region
        $region49: #{tpu_custom_call.1} parent=47 // pred_check
          %p251 = pneg %p106
        $region50: #{tpu_custom_call.1} parent=47 // pred_check_branch
          %253 = sbr.rel (%p251) target = $region52
        $region51: #{tpu_custom_call.1} parent=47 // pred_region
          %p254 = scmp.lt.s32.totalorder %s22, 1
          %s255 = scalar_select %p254, %s22, 1
          %s256 = smul.addr %s255, 8
          %s257 = scalar_lea.vmem %s2, %s256
        $region52: #{tpu_custom_call.1} parent=47 // pred_fallthru
          _
      $region48: #{tpu_custom_call.1} parent=5 // pred_fallthru
        _
    $region6: #{tpu_custom_call.1} parent=1 // loop_footer
      %s15 = sadd.s32 1, %s11
    $region7: #{tpu_custom_call.1} parent=1 // loop_footer_branch
      %10 = sbr.rel target = $region3
    $region8: #{tpu_custom_call.1} parent=1 // loop_exit
      _
    %258 = vsyncpa [#allocation5], 1
    %s259 = scalar_lea.sflag [#allocation5], 1
    %260 = vsyncpa %s259, 1

</llo_original>
